<compile_context>
chip_gen: v6e
topology: v6e:2x2x1
jax: 0.10.0
libtpu: 0.0.40
codegen_flags: <defaults>
</compile_context>

<pallas_src>
import jax
import jax.numpy as jnp
from jax.experimental import pallas as pl
from jax.experimental.pallas import tpu as pltpu


def _round_up(x, m):
    return ((x + m - 1) // m) * m


def qnetwork_kernel(x_ref, w1_ref, b1_ref, w2_ref, b2_ref, w3_ref, b3_ref, out_ref):
    # One (TILE_B, state) tile of the batch; full forward in VMEM.
    x = x_ref[...].astype(jnp.bfloat16)                               # in-kernel cast (VPU, free)
    h1 = jnp.dot(x, w1_ref[...], preferred_element_type=jnp.float32) + b1_ref[...]
    h1 = jnp.maximum(h1, 0.0).astype(jnp.bfloat16)                    # bf16 into next MXU op
    h2 = jnp.dot(h1, w2_ref[...], preferred_element_type=jnp.float32) + b2_ref[...]
    h2 = jnp.maximum(h2, 0.0).astype(jnp.bfloat16)
    y = jnp.dot(h2, w3_ref[...], preferred_element_type=jnp.float32) + b3_ref[...]
    out_ref[...] = y.astype(out_ref.dtype)                            # bf16, lane-dense (>=128) store


def prepare_params(params):
    """One-time parameter preprocessing (hoisted off the hot path).

    * Pads the final layer's output columns up to a multiple of 128 so kernel
      stores are full-width vst.
    * Casts weights to bf16 (MXU inputs). Biases stay f32 (added to the f32
      accumulator).
    Call once and reuse the result for every forward call.
    """
    w1, b1, w2, b2, w3, b3 = (
        params["w1"], params["b1"], params["w2"],
        params["b2"], params["w3"], params["b3"],
    )
    action_size = w3.shape[1]
    n_out = _round_up(max(action_size, 128), 128)
    if n_out != action_size:
        w3 = jnp.pad(w3, ((0, 0), (0, n_out - action_size)))
        b3 = jnp.pad(b3, ((0, 0), (0, n_out - action_size)))
    return {
        "w1": w1.astype(jnp.bfloat16), "b1": b1,
        "w2": w2.astype(jnp.bfloat16), "b2": b2,
        "w3": w3.astype(jnp.bfloat16), "b3": b3,
        "action_size": action_size,
    }


def qnetwork_forward(x, prepared, *, tile_b=2048):
    """x: (B, state_size) float32. prepared: output of prepare_params().

    Returns (B, action_size) bfloat16 Q-values (cast to f32 outside if needed).
    """
    w1, b1 = prepared["w1"], prepared["b1"]
    w2, b2 = prepared["w2"], prepared["b2"]
    w3, b3 = prepared["w3"], prepared["b3"]
    action_size = prepared["action_size"]

    B, state_size = x.shape
    fc1_units = w1.shape[1]
    fc2_units = w2.shape[1]
    n_out = w3.shape[1]  # already padded to a multiple of 128

    # ---- Batch tiling: 16-row granularity (bf16 vreg packing is (16, 128)).
    b16 = _round_up(B, 16)
    tile = _round_up(min(tile_b, b16), 16)
    # v7x megacore: for large batches make sure the grid has >= 2 steps so the
    # "parallel" axis can shard work across both TensorCores. Small batches
    # keep one big tile (per-step overhead amortization wins there).
    if b16 >= 512:
        tile = min(tile, _round_up(pl.cdiv(b16, 2), 16))
    b_pad = _round_up(B, tile)

    # NOTE: zero-padded batch rows run through the full network and produce
    # junk rows (biases propagate through ReLU); they are sliced off below.
    # Do NOT reduce over padded rows inside the kernel.
    if b_pad != B:
        x = jnp.pad(x, ((0, b_pad - B), (0, 0)))

    grid = (b_pad // tile,)

    out = pl.pallas_call(
        qnetwork_kernel,
        out_shape=jax.ShapeDtypeStruct((b_pad, n_out), jnp.bfloat16),
        grid=grid,
        in_specs=[
            # x tile marches over the batch (f32, cast in-kernel).
            pl.BlockSpec((tile, state_size), lambda i: (i, 0)),
            # Weights / biases: constant index_map -> VMEM-resident.
            pl.BlockSpec((state_size, fc1_units), lambda i: (0, 0)),
            pl.BlockSpec((1, fc1_units), lambda i: (0, 0)),
            pl.BlockSpec((fc1_units, fc2_units), lambda i: (0, 0)),
            pl.BlockSpec((1, fc2_units), lambda i: (0, 0)),
            pl.BlockSpec((fc2_units, n_out), lambda i: (0, 0)),
            pl.BlockSpec((1, n_out), lambda i: (0, 0)),
        ],
        out_specs=pl.BlockSpec((tile, n_out), lambda i: (i, 0)),
        compiler_params=pltpu.CompilerParams(
            dimension_semantics=("parallel",),  # megacore sharding on v7x
        ),
    )(x, w1, b1, w2, b2, w3, b3)

    # Strip batch padding and the zero-padded output columns.
    return out[:B, :action_size]


def init_params(key, state_size, action_size, fc1_units=128, fc2_units=128):
    """Deterministic init mimicking PyTorch nn.Linear default (U(-1/sqrt(fan_in), +))."""
    def linear(key, fan_in, fan_out):
        kw, kb = jax.random.split(key)
        bound = 1.0 / jnp.sqrt(fan_in)
        # stored as (in, out) so the kernel does x @ W
        w = jax.random.uniform(kw, (fan_in, fan_out), jnp.float32, -bound, bound)
        b = jax.random.uniform(kb, (1, fan_out), jnp.float32, -bound, bound)
        return w, b

    k1, k2, k3 = jax.random.split(key, 3)
    w1, b1 = linear(k1, state_size, fc1_units)
    w2, b2 = linear(k2, fc1_units, fc2_units)
    w3, b3 = linear(k3, fc2_units, action_size)
    return {"w1": w1, "b1": b1, "w2": w2, "b2": b2, "w3": w3, "b3": b3}


if __name__ == "__main__":
    key = jax.random.PRNGKey(0)
    k_params, k_x = jax.random.split(key)

    batch = 8
    state_size = 32
    action_size = 8

    params = init_params(k_params, state_size, action_size)
    prepared = prepare_params(params)          # one-time, off the hot path
    x = jax.random.normal(k_x, (batch, state_size), jnp.float32)

    out = qnetwork_forward(x, prepared)
    out = jax.block_until_ready(out)
    out_f32 = out.astype(jnp.float32)

    # Reference in plain JAX (full f32). Kernel uses bf16 MXU inputs with f32
    # accumulation and a bf16 output store, so loosen tolerance accordingly.
    ref = x
    ref = jnp.maximum(ref @ params["w1"] + params["b1"], 0.0)
    ref = jnp.maximum(ref @ params["w2"] + params["b2"], 0.0)
    ref = ref @ params["w3"] + params["b3"]
    assert out.shape == (batch, action_size)
    assert jnp.allclose(out_f32, ref, atol=5e-2, rtol=5e-2), float(
        jnp.max(jnp.abs(out_f32 - ref))
    )

    print("KERNEL_OK")
</pallas_src>

<mosaic_0001>
module attributes {stable_mosaic.version = 11 : i64} {
  func.func @qnetwork_kernel(%arg0: i32, %arg1: memref<16x32xf32, #tpu.memory_space<vmem>>, %arg2: memref<32x128xbf16, #tpu.memory_space<vmem>>, %arg3: memref<1x128xf32, #tpu.memory_space<vmem>>, %arg4: memref<128x128xbf16, #tpu.memory_space<vmem>>, %arg5: memref<1x128xf32, #tpu.memory_space<vmem>>, %arg6: memref<128x128xbf16, #tpu.memory_space<vmem>>, %arg7: memref<1x128xf32, #tpu.memory_space<vmem>>, %arg8: memref<16x128xbf16, #tpu.memory_space<vmem>>) attributes {dimension_semantics = [#tpu.dimension_semantics<parallel>], iteration_bounds = array<i64: 1>, scalar_prefetch = 0 : i64, scratch_operands = 0 : i64, tpu.core_type = #tpu.core_type<tc>, window_params = [{transform_indices = @transform_0, window_bounds = array<i64: 16, 32>}, {pipeline_mode = #tpu.pipeline_mode<synchronous>, transform_indices = @transform_1, window_bounds = array<i64: 32, 128>}, {pipeline_mode = #tpu.pipeline_mode<synchronous>, transform_indices = @transform_2, window_bounds = array<i64: 1, 128>}, {pipeline_mode = #tpu.pipeline_mode<synchronous>, transform_indices = @transform_3, window_bounds = array<i64: 128, 128>}, {pipeline_mode = #tpu.pipeline_mode<synchronous>, transform_indices = @transform_4, window_bounds = array<i64: 1, 128>}, {pipeline_mode = #tpu.pipeline_mode<synchronous>, transform_indices = @transform_5, window_bounds = array<i64: 128, 128>}, {pipeline_mode = #tpu.pipeline_mode<synchronous>, transform_indices = @transform_6, window_bounds = array<i64: 1, 128>}, {transform_indices = @transform_7, window_bounds = array<i64: 16, 128>}]} {
    %c0 = arith.constant 0 : index
    %c0_0 = arith.constant 0 : index
    %0 = vector.load %arg1[%c0, %c0_0] : memref<16x32xf32, #tpu.memory_space<vmem>>, vector<16x32xf32>
    %1 = arith.truncf %0 : vector<16x32xf32> to vector<16x32xbf16>
    %c0_1 = arith.constant 0 : index
    %c0_2 = arith.constant 0 : index
    %2 = vector.load %arg2[%c0_1, %c0_2] : memref<32x128xbf16, #tpu.memory_space<vmem>>, vector<32x128xbf16>
    %cst = arith.constant dense<0.000000e+00> : vector<16x128xf32>
    %3 = tpu.matmul %1, %2, %cst {dimension_numbers = #tpu.dot_dimension_numbers<[1], [0], [0], [1], [0, 0, 1, 1], [], []>} : vector<16x32xbf16>, vector<32x128xbf16>, vector<16x128xf32> -> vector<16x128xf32>
    %c0_3 = arith.constant 0 : index
    %c0_4 = arith.constant 0 : index
    %4 = vector.load %arg3[%c0_3, %c0_4] : memref<1x128xf32, #tpu.memory_space<vmem>>, vector<1x128xf32>
    %5 = vector.broadcast %4 : vector<1x128xf32> to vector<16x128xf32>
    %6 = arith.addf %3, %5 : vector<16x128xf32>
    %cst_5 = arith.constant 0.000000e+00 : f32
    %7 = vector.broadcast %cst_5 : f32 to vector<16x128xf32>
    %8 = arith.maximumf %6, %7 : vector<16x128xf32>
    %9 = arith.truncf %8 : vector<16x128xf32> to vector<16x128xbf16>
    %c0_6 = arith.constant 0 : index
    %c0_7 = arith.constant 0 : index
    %10 = vector.load %arg4[%c0_6, %c0_7] : memref<128x128xbf16, #tpu.memory_space<vmem>>, vector<128x128xbf16>
    %cst_8 = arith.constant dense<0.000000e+00> : vector<16x128xf32>
    %11 = tpu.matmul %9, %10, %cst_8 {dimension_numbers = #tpu.dot_dimension_numbers<[1], [0], [0], [1], [0, 0, 1, 1], [], []>} : vector<16x128xbf16>, vector<128x128xbf16>, vector<16x128xf32> -> vector<16x128xf32>
    %c0_9 = arith.constant 0 : index
    %c0_10 = arith.constant 0 : index
    %12 = vector.load %arg5[%c0_9, %c0_10] : memref<1x128xf32, #tpu.memory_space<vmem>>, vector<1x128xf32>
    %13 = vector.broadcast %12 : vector<1x128xf32> to vector<16x128xf32>
    %14 = arith.addf %11, %13 : vector<16x128xf32>
    %cst_11 = arith.constant 0.000000e+00 : f32
    %15 = vector.broadcast %cst_11 : f32 to vector<16x128xf32>
    %16 = arith.maximumf %14, %15 : vector<16x128xf32>
    %17 = arith.truncf %16 : vector<16x128xf32> to vector<16x128xbf16>
    %c0_12 = arith.constant 0 : index
    %c0_13 = arith.constant 0 : index
    %18 = vector.load %arg6[%c0_12, %c0_13] : memref<128x128xbf16, #tpu.memory_space<vmem>>, vector<128x128xbf16>
    %cst_14 = arith.constant dense<0.000000e+00> : vector<16x128xf32>
    %19 = tpu.matmul %17, %18, %cst_14 {dimension_numbers = #tpu.dot_dimension_numbers<[1], [0], [0], [1], [0, 0, 1, 1], [], []>} : vector<16x128xbf16>, vector<128x128xbf16>, vector<16x128xf32> -> vector<16x128xf32>
    %c0_15 = arith.constant 0 : index
    %c0_16 = arith.constant 0 : index
    %20 = vector.load %arg7[%c0_15, %c0_16] : memref<1x128xf32, #tpu.memory_space<vmem>>, vector<1x128xf32>
    %21 = vector.broadcast %20 : vector<1x128xf32> to vector<16x128xf32>
    %22 = arith.addf %19, %21 : vector<16x128xf32>
    %23 = arith.truncf %22 : vector<16x128xf32> to vector<16x128xbf16>
    %c0_17 = arith.constant 0 : index
    %c0_18 = arith.constant 0 : index
    %24 = vector.load %arg8[%c0_17, %c0_18] : memref<16x128xbf16, #tpu.memory_space<vmem>>, vector<16x128xbf16>
    tpu.vector_store %arg8[%c0_17, %c0_18], %23 {strides = array<i32>} : memref<16x128xbf16, #tpu.memory_space<vmem>>, vector<16x128xbf16>,
    return
  }
  func.func @transform_0(%arg0: i32) -> (i32, i32) {
    %c0_i32 = arith.constant 0 : i32
    %c0_i32_0 = arith.constant 0 : i32
    return %arg0, %c0_i32 : i32, i32
  }
  func.func @transform_1(%arg0: i32) -> (i32, i32) {
    %c0_i32 = arith.constant 0 : i32
    %c0_i32_0 = arith.constant 0 : i32
    %c0_i32_1 = arith.constant 0 : i32
    return %c0_i32, %c0_i32_0 : i32, i32
  }
  func.func @transform_2(%arg0: i32) -> (i32, i32) {
    %c0_i32 = arith.constant 0 : i32
    %c0_i32_0 = arith.constant 0 : i32
    %c0_i32_1 = arith.constant 0 : i32
    return %c0_i32, %c0_i32_0 : i32, i32
  }
  func.func @transform_3(%arg0: i32) -> (i32, i32) {
    %c0_i32 = arith.constant 0 : i32
    %c0_i32_0 = arith.constant 0 : i32
    %c0_i32_1 = arith.constant 0 : i32
    return %c0_i32, %c0_i32_0 : i32, i32
  }
  func.func @transform_4(%arg0: i32) -> (i32, i32) {
    %c0_i32 = arith.constant 0 : i32
    %c0_i32_0 = arith.constant 0 : i32
    %c0_i32_1 = arith.constant 0 : i32
    return %c0_i32, %c0_i32_0 : i32, i32
  }
  func.func @transform_5(%arg0: i32) -> (i32, i32) {
    %c0_i32 = arith.constant 0 : i32
    %c0_i32_0 = arith.constant 0 : i32
    %c0_i32_1 = arith.constant 0 : i32
    return %c0_i32, %c0_i32_0 : i32, i32
  }
  func.func @transform_6(%arg0: i32) -> (i32, i32) {
    %c0_i32 = arith.constant 0 : i32
    %c0_i32_0 = arith.constant 0 : i32
    %c0_i32_1 = arith.constant 0 : i32
    return %c0_i32, %c0_i32_0 : i32, i32
  }
  func.func @transform_7(%arg0: i32) -> (i32, i32) {
    %c0_i32 = arith.constant 0 : i32
    %c0_i32_0 = arith.constant 0 : i32
    return %arg0, %c0_i32 : i32, i32
  }
}

</mosaic_0001>

<llo_original>
// kernel: tpu_custom_call.1
$region0: #{tpu_custom_call.1}
  #allocation0 [shape = 'u32[]', space=smem, size = 0x4, offset = 0x4, fixed_abs, tag = 'smem constant byte address 0x4 - core index']
  #allocation1 [shape = 'u32[144,128]{1,0:T(1,128)}', space=vmem, size = 0x12000, scoped, tag = 'internal scratch']
  %s0 = inlined_call_operand.hbm [shape: f32[16,32], index: 0, kind: input, shape index: {}]
  %s1 = inlined_call_operand.hbm [shape: bf16[32,128], index: 1, kind: input, shape index: {}]
  %s2 = inlined_call_operand.vmem [shape: f32[1,128], index: 2, kind: input, shape index: {}]
  %s3 = inlined_call_operand.hbm [shape: bf16[128,128], index: 3, kind: input, shape index: {}]
  %s4 = inlined_call_operand.vmem [shape: f32[1,128], index: 4, kind: input, shape index: {}]
  %s5 = inlined_call_operand.hbm [shape: bf16[128,128], index: 5, kind: input, shape index: {}]
  %s6 = inlined_call_operand.vmem [shape: f32[1,128], index: 6, kind: input, shape index: {}]
  %s7 = inlined_call_operand.hbm [shape: bf16[16,128], index: 7, kind: output, shape index: {}]
  %s8 = sld [smem:[#allocation0]]
  $region54: #{tpu_custom_call.1} parent=0
    _
  %s10 = ssub.s32 1, %s8
  %s11 = scalar_select 0, %s10, %s8
  $region1: #{tpu_custom_call.1} parent=0
    #allocation2 [shape = 'u8[8192]{0}', space=vmem, size = 0x2000, scoped, tag = 'input window, operand 0, single buffered']
    #allocation3 [shape = 's32[1]{0}', space=sflag, size = 0x4, scoped, tag = 'scoped memory for tpu_custom_call.1']
    #allocation4 [shape = 's32[1]{0}', space=sflag, size = 0x4, scoped, tag = 'scoped memory for tpu_custom_call.1']
    #allocation5 [shape = 'u8[8192]{0}', space=vmem, size = 0x2000, scoped, tag = 'input window, operand 1, single buffered']
    #allocation6 [shape = 's32[1]{0}', space=sflag, size = 0x4, scoped, tag = 'scoped memory for tpu_custom_call.1']
    #allocation7 [shape = 'u8[32768]{0}', space=vmem, size = 0x8000, scoped, tag = 'input window, operand 3, single buffered']
    #allocation8 [shape = 'u8[32768]{0}', space=vmem, size = 0x8000, scoped, tag = 'input window, operand 5, single buffered']
    #allocation9 [shape = 's32[1]{0}', space=sflag, size = 0x4, scoped, tag = 'scoped memory for tpu_custom_call.1']
    #allocation10 [shape = 'u8[4096]{0}', space=vmem, size = 0x1000, scoped, tag = 'output window, operand 0, single buffered']
    %12 = vsyncpa [#allocation3], 0
    %13 = vsyncpa [#allocation6], 0
    %14 = vsyncpa [#allocation9], 0
    %15 = vsyncpa [#allocation4], 0
    // Predicated region
    $region2: #{tpu_custom_call.1} parent=1 // pred_check
      _
    $region3: #{tpu_custom_call.1} parent=1 // pred_check_branch
      %17 = sbr.rel (0) target = $region5
    $region4: #{tpu_custom_call.1} parent=1 // pred_region
      %s19 = ssub.s32 256, 256
      %20 = vsyncadd [#allocation3], %s19
      %s21 = sshll.u32 [#allocation2], 4
      %s22 = int_to_ptr.vmem [resolvable:$true] %s21
      %27 = dma.hbm_to_vmem [thread:$0]  %s0, 256, %s22, [#allocation3], 128, 128, 8
    $region5: #{tpu_custom_call.1} parent=1 // pred_fallthru
      _
    // Predicated region
    $region6: #{tpu_custom_call.1} parent=1 // pred_check
      _
    $region7: #{tpu_custom_call.1} parent=1 // pred_check_branch
      %29 = sbr.rel (0) target = $region9
    $region8: #{tpu_custom_call.1} parent=1 // pred_region
      %s31 = ssub.s32 256, 256
      %32 = vsyncadd [#allocation6], %s31
      %s33 = sshll.u32 [#allocation5], 4
      %s34 = int_to_ptr.vmem [resolvable:$true] %s33
      %39 = dma.hbm_to_vmem [thread:$0]  %s1, 256, %s34, [#allocation6], 64, 64, 4
    $region9: #{tpu_custom_call.1} parent=1 // pred_fallthru
      _
    // Predicated region
    $region10: #{tpu_custom_call.1} parent=1 // pred_check
      _
    $region11: #{tpu_custom_call.1} parent=1 // pred_check_branch
      %41 = sbr.rel (0) target = $region13
    $region12: #{tpu_custom_call.1} parent=1 // pred_region
      _
    $region13: #{tpu_custom_call.1} parent=1 // pred_fallthru
      _
    // Predicated region
    $region14: #{tpu_custom_call.1} parent=1 // pred_check
      _
    $region15: #{tpu_custom_call.1} parent=1 // pred_check_branch
      %43 = sbr.rel (0) target = $region17
    $region16: #{tpu_custom_call.1} parent=1 // pred_region
      %s45 = ssub.s32 1024, 1024
      %46 = vsyncadd [#allocation6], %s45
      %s47 = sshll.u32 [#allocation7], 4
      %s48 = int_to_ptr.vmem [resolvable:$true] %s47
      %53 = dma.hbm_to_vmem [thread:$0]  %s3, 1024, %s48, [#allocation6], 64, 64, 4
    $region17: #{tpu_custom_call.1} parent=1 // pred_fallthru
      _
    // Predicated region
    $region18: #{tpu_custom_call.1} parent=1 // pred_check
      _
    $region19: #{tpu_custom_call.1} parent=1 // pred_check_branch
      %55 = sbr.rel (0) target = $region21
    $region20: #{tpu_custom_call.1} parent=1 // pred_region
      _
    $region21: #{tpu_custom_call.1} parent=1 // pred_fallthru
      _
    // Predicated region
    $region22: #{tpu_custom_call.1} parent=1 // pred_check
      _
    $region23: #{tpu_custom_call.1} parent=1 // pred_check_branch
      %57 = sbr.rel (0) target = $region25
    $region24: #{tpu_custom_call.1} parent=1 // pred_region
      %s59 = ssub.s32 1024, 1024
      %60 = vsyncadd [#allocation9], %s59
      %s61 = sshll.u32 [#allocation8], 4
      %s62 = int_to_ptr.vmem [resolvable:$true] %s61
      %67 = dma.hbm_to_vmem [thread:$0]  %s5, 1024, %s62, [#allocation9], 64, 64, 4
    $region25: #{tpu_custom_call.1} parent=1 // pred_fallthru
      _
    // Predicated region
    $region26: #{tpu_custom_call.1} parent=1 // pred_check
      _
    $region27: #{tpu_custom_call.1} parent=1 // pred_check_branch
      %69 = sbr.rel (0) target = $region29
    $region28: #{tpu_custom_call.1} parent=1 // pred_region
      _
    $region29: #{tpu_custom_call.1} parent=1 // pred_fallthru
      _
    // Predicated region
    $region30: #{tpu_custom_call.1} parent=1 // pred_check
      _
    $region31: #{tpu_custom_call.1} parent=1 // pred_check_branch
      %71 = sbr.rel (0) target = $region33
    $region32: #{tpu_custom_call.1} parent=1 // pred_region
      %72 = dma.done [#allocation3], 256
    $region33: #{tpu_custom_call.1} parent=1 // pred_fallthru
      _
    // Predicated region
    $region34: #{tpu_custom_call.1} parent=1 // pred_check
      _
    $region35: #{tpu_custom_call.1} parent=1 // pred_check_branch
      %74 = sbr.rel (0) target = $region37
    $region36: #{tpu_custom_call.1} parent=1 // pred_region
      %75 = dma.done [#allocation6], 256
    $region37: #{tpu_custom_call.1} parent=1 // pred_fallthru
      _
    // Predicated region
    $region38: #{tpu_custom_call.1} parent=1 // pred_check
      _
    $region39: #{tpu_custom_call.1} parent=1 // pred_check_branch
      %77 = sbr.rel (0) target = $region41
    $region40: #{tpu_custom_call.1} parent=1 // pred_region
      %78 = dma.done [#allocation6], 1024
    $region41: #{tpu_custom_call.1} parent=1 // pred_fallthru
      _
    // Predicated region
    $region42: #{tpu_custom_call.1} parent=1 // pred_check
      _
    $region43: #{tpu_custom_call.1} parent=1 // pred_check_branch
      %80 = sbr.rel (0) target = $region45
    $region44: #{tpu_custom_call.1} parent=1 // pred_region
      %81 = dma.done [#allocation9], 1024
    $region45: #{tpu_custom_call.1} parent=1 // pred_fallthru
      _
    %v83 = vld [vmem:[#allocation2] sm:$0xff]
    %v84 = vld [vmem:[#allocation2 + $0x8] sm:$0xff]
    %v85 = vpack.c.bf16 %v84, %v83
    %v86 = vld [vmem:[#allocation5] sm:$0xf]
    %v87 = vld [vmem:[#allocation5 + $0x4] sm:$0xf]
    %v88 = vld [vmem:[#allocation5 + $0x8] sm:$0xf]
    %v89 = vld [vmem:[#allocation5 + $0xc] sm:$0xf]
    %v90 = vld [vmem:[%s2] sm:$0x1]
    %v92 = vlaneseq
    %v93 = vshrl.u32 %v92, 7
    %v94 = vsub.s32 0, %v93
    %v95 = vrot.slane %v90, %v94
    %v101 = vunpack.c.l.b16 %v86
    %v102 = vunpack.c.l.b16 %v87
    %v103 = vunpack.c.l.b16 %v88
    %v104 = vunpack.c.l.b16 %v89
    %v105 = vpack.c.b16 %v102, %v101
    %v106 = vpack.c.b16 %v104, %v103
    %vm109 = vcmask 261120
    %v111 = vsel %vm109, %v85, 0
    %113 = vmatprep.subr.bf16.mxu0 0
    %114 = vmatpush1.bf16.msra.mxu0 0
    %115 = vmatprep.subr.bf16.mxu0 0
    %116 = vmatpush1.bf16.msra.mxu0 0
    %117 = vmatprep.subr.bf16.mxu0 0
    %118 = vmatpush1.bf16.msra.mxu0 0
    %119 = vmatprep.subr.bf16.mxu0 0
    %120 = vmatpush1.bf16.msra.mxu0 0
    %121 = vmatprep.subr.bf16.mxu0 0
    %122 = vmatpush1.bf16.msra.mxu0 0
    %123 = vmatprep.subr.bf16.mxu0 0
    %124 = vmatpush1.bf16.msra.mxu0 0
    %125 = vmatprep.subr.bf16.mxu0 0
    %126 = vmatpush1.bf16.msra.mxu0 %v106
    %127 = vmatprep.subr.bf16.mxu0 0
    %128 = vmatpush1.bf16.msra.mxu0 %v105
    %129 = vmatprep.subr.bf16.mxu0 0
    %130 = vmatpush2.bf16.msra.mxu0 0
    %131 = vmatprep.subr.bf16.mxu0 0
    %132 = vmatpush2.bf16.msra.mxu0 0
    %133 = vmatprep.subr.bf16.mxu0 0
    %134 = vmatpush2.bf16.msra.mxu0 0
    %135 = vmatprep.subr.bf16.mxu0 0
    %136 = vmatpush2.bf16.msra.mxu0 0
    %137 = vmatprep.subr.bf16.mxu0 0
    %138 = vmatpush2.bf16.msra.mxu0 0
    %139 = vmatprep.subr.bf16.mxu0 0
    %140 = vmatpush2.bf16.msra.mxu0 0
    %141 = vmatprep.subr.bf16.mxu0 0
    %142 = vmatpush2.bf16.msra.mxu0 0
    %143 = vmatprep.subr.bf16.mxu0 0
    %144 = vmatpush2.bf16.msra.mxu0 0
    %145 = vmatprep.mubr.bf16.mxu0 0
    %146 = vmatmul.mubr.bf16.gmra.mxu0 %v111
    %v147 = vpop.f32.mrf.mxu0
    %v148 = vadd.f32 %v95, %v147
    %v149 = vpop.f32.mrf.mxu0
    %v150 = vpop.f32.mrf.mxu0
    %v151 = vadd.f32 %v95, %v150
    %v152 = vpop.f32.mrf.mxu0
    %153 = vdwg.mxu0
    %v154 = vmax.f32 %v148, 0.0
    %v155 = vmax.f32 %v151, 0.0
    %v156 = vpack.c.bf16 %v155, %v154
    %v157 = vld [vmem:[#allocation7] sm:$0xf]
    %v158 = vld [vmem:[#allocation7 + $0x4] sm:$0xf]
    %v159 = vld [vmem:[#allocation7 + $0x8] sm:$0xf]
    %v160 = vld [vmem:[#allocation7 + $0xc] sm:$0xf]
    %v161 = vld [vmem:[#allocation7 + $0x10] sm:$0xf]
    %v162 = vld [vmem:[#allocation7 + $0x14] sm:$0xf]
    %v163 = vld [vmem:[#allocation7 + $0x18] sm:$0xf]
    %v164 = vld [vmem:[#allocation7 + $0x1c] sm:$0xf]
    %v165 = vld [vmem:[#allocation7 + $0x20] sm:$0xf]
    %v166 = vld [vmem:[#allocation7 + $0x24] sm:$0xf]
    %v167 = vld [vmem:[#allocation7 + $0x28] sm:$0xf]
    %v168 = vld [vmem:[#allocation7 + $0x2c] sm:$0xf]
    %v169 = vld [vmem:[#allocation7 + $0x30] sm:$0xf]
    %v170 = vld [vmem:[#allocation7 + $0x34] sm:$0xf]
    %v171 = vld [vmem:[#allocation7 + $0x38] sm:$0xf]
    %v172 = vld [vmem:[#allocation7 + $0x3c] sm:$0xf]
    %v173 = vld [vmem:[%s4] sm:$0x1]
    %v175 = vlaneseq
    %v176 = vshrl.u32 %v175, 7
    %v177 = vsub.s32 0, %v176
    %v178 = vrot.slane %v173, %v177
    %v196 = vunpack.c.l.b16 %v157
    %v197 = vunpack.c.l.b16 %v158
    %v198 = vunpack.c.l.b16 %v159
    %v199 = vunpack.c.l.b16 %v160
    %v200 = vunpack.c.l.b16 %v161
    %v201 = vunpack.c.l.b16 %v162
    %v202 = vunpack.c.l.b16 %v163
    %v203 = vunpack.c.l.b16 %v164
    %v204 = vunpack.c.l.b16 %v165
    %v205 = vunpack.c.l.b16 %v166
    %v206 = vunpack.c.l.b16 %v167
    %v207 = vunpack.c.l.b16 %v168
    %v208 = vunpack.c.l.b16 %v169
    %v209 = vunpack.c.l.b16 %v170
    %v210 = vunpack.c.l.b16 %v171
    %v211 = vunpack.c.l.b16 %v172
    %v212 = vpack.c.b16 %v197, %v196
    %v213 = vpack.c.b16 %v199, %v198
    %v214 = vpack.c.b16 %v201, %v200
    %v215 = vpack.c.b16 %v203, %v202
    %v216 = vpack.c.b16 %v205, %v204
    %v217 = vpack.c.b16 %v207, %v206
    %v218 = vpack.c.b16 %v209, %v208
    %v219 = vpack.c.b16 %v211, %v210
    %228 = vmatprep.subr.bf16.mxu0 0
    %229 = vmatpush1.bf16.msra.mxu0 %v219
    %230 = vmatprep.subr.bf16.mxu0 0
    %231 = vmatpush1.bf16.msra.mxu0 %v218
    %232 = vmatprep.subr.bf16.mxu0 0
    %233 = vmatpush1.bf16.msra.mxu0 %v217
    %234 = vmatprep.subr.bf16.mxu0 0
    %235 = vmatpush1.bf16.msra.mxu0 %v216
    %236 = vmatprep.subr.bf16.mxu0 0
    %237 = vmatpush1.bf16.msra.mxu0 %v215
    %238 = vmatprep.subr.bf16.mxu0 0
    %239 = vmatpush1.bf16.msra.mxu0 %v214
    %240 = vmatprep.subr.bf16.mxu0 0
    %241 = vmatpush1.bf16.msra.mxu0 %v213
    %242 = vmatprep.subr.bf16.mxu0 0
    %243 = vmatpush1.bf16.msra.mxu0 %v212
    %244 = vmatprep.subr.bf16.mxu0 0
    %245 = vmatpush2.bf16.msra.mxu0 0
    %246 = vmatprep.subr.bf16.mxu0 0
    %247 = vmatpush2.bf16.msra.mxu0 0
    %248 = vmatprep.subr.bf16.mxu0 0
    %249 = vmatpush2.bf16.msra.mxu0 0
    %250 = vmatprep.subr.bf16.mxu0 0
    %251 = vmatpush2.bf16.msra.mxu0 0
    %252 = vmatprep.subr.bf16.mxu0 0
    %253 = vmatpush2.bf16.msra.mxu0 0
    %254 = vmatprep.subr.bf16.mxu0 0
    %255 = vmatpush2.bf16.msra.mxu0 0
    %256 = vmatprep.subr.bf16.mxu0 0
    %257 = vmatpush2.bf16.msra.mxu0 0
    %258 = vmatprep.subr.bf16.mxu0 0
    %259 = vmatpush2.bf16.msra.mxu0 0
    %260 = vmatprep.mubr.bf16.mxu0 0
    %261 = vmatmul.mubr.bf16.gmra.mxu0 %v156
    %v262 = vpop.f32.mrf.mxu0
    %v263 = vadd.f32 %v178, %v262
    %v264 = vpop.f32.mrf.mxu0
    %v265 = vpop.f32.mrf.mxu0
    %v266 = vadd.f32 %v178, %v265
    %v267 = vpop.f32.mrf.mxu0
    %268 = vdwg.mxu0
    %v269 = vmax.f32 %v263, 0.0
    %v270 = vmax.f32 %v266, 0.0
    %v271 = vpack.c.bf16 %v270, %v269
    %v272 = vld [vmem:[#allocation8] sm:$0xf]
    %v273 = vld [vmem:[#allocation8 + $0x4] sm:$0xf]
    %v274 = vld [vmem:[#allocation8 + $0x8] sm:$0xf]
    %v275 = vld [vmem:[#allocation8 + $0xc] sm:$0xf]
    %v276 = vld [vmem:[#allocation8 + $0x10] sm:$0xf]
    %v277 = vld [vmem:[#allocation8 + $0x14] sm:$0xf]
    %v278 = vld [vmem:[#allocation8 + $0x18] sm:$0xf]
    %v279 = vld [vmem:[#allocation8 + $0x1c] sm:$0xf]
    %v280 = vld [vmem:[#allocation8 + $0x20] sm:$0xf]
    %v281 = vld [vmem:[#allocation8 + $0x24] sm:$0xf]
    %v282 = vld [vmem:[#allocation8 + $0x28] sm:$0xf]
    %v283 = vld [vmem:[#allocation8 + $0x2c] sm:$0xf]
    %v284 = vld [vmem:[#allocation8 + $0x30] sm:$0xf]
    %v285 = vld [vmem:[#allocation8 + $0x34] sm:$0xf]
    %v286 = vld [vmem:[#allocation8 + $0x38] sm:$0xf]
    %v287 = vld [vmem:[#allocation8 + $0x3c] sm:$0xf]
    %v288 = vld [vmem:[%s6] sm:$0x1]
    %v290 = vlaneseq
    %v291 = vshrl.u32 %v290, 7
    %v292 = vsub.s32 0, %v291
    %v293 = vrot.slane %v288, %v292
    %v311 = vunpack.c.l.b16 %v272
    %v312 = vunpack.c.l.b16 %v273
    %v313 = vunpack.c.l.b16 %v274
    %v314 = vunpack.c.l.b16 %v275
    %v315 = vunpack.c.l.b16 %v276
    %v316 = vunpack.c.l.b16 %v277
    %v317 = vunpack.c.l.b16 %v278
    %v318 = vunpack.c.l.b16 %v279
    %v319 = vunpack.c.l.b16 %v280
    %v320 = vunpack.c.l.b16 %v281
    %v321 = vunpack.c.l.b16 %v282
    %v322 = vunpack.c.l.b16 %v283
    %v323 = vunpack.c.l.b16 %v284
    %v324 = vunpack.c.l.b16 %v285
    %v325 = vunpack.c.l.b16 %v286
    %v326 = vunpack.c.l.b16 %v287
    %v327 = vpack.c.b16 %v312, %v311
    %v328 = vpack.c.b16 %v314, %v313
    %v329 = vpack.c.b16 %v316, %v315
    %v330 = vpack.c.b16 %v318, %v317
    %v331 = vpack.c.b16 %v320, %v319
    %v332 = vpack.c.b16 %v322, %v321
    %v333 = vpack.c.b16 %v324, %v323
    %v334 = vpack.c.b16 %v326, %v325
    %343 = vmatprep.subr.bf16.mxu0 0
    %344 = vmatpush1.bf16.msra.mxu0 %v334
    %345 = vmatprep.subr.bf16.mxu0 0
    %346 = vmatpush1.bf16.msra.mxu0 %v333
    %347 = vmatprep.subr.bf16.mxu0 0
    %348 = vmatpush1.bf16.msra.mxu0 %v332
    %349 = vmatprep.subr.bf16.mxu0 0
    %350 = vmatpush1.bf16.msra.mxu0 %v331
    %351 = vmatprep.subr.bf16.mxu0 0
    %352 = vmatpush1.bf16.msra.mxu0 %v330
    %353 = vmatprep.subr.bf16.mxu0 0
    %354 = vmatpush1.bf16.msra.mxu0 %v329
    %355 = vmatprep.subr.bf16.mxu0 0
    %356 = vmatpush1.bf16.msra.mxu0 %v328
    %357 = vmatprep.subr.bf16.mxu0 0
    %358 = vmatpush1.bf16.msra.mxu0 %v327
    %359 = vmatprep.subr.bf16.mxu0 0
    %360 = vmatpush2.bf16.msra.mxu0 0
    %361 = vmatprep.subr.bf16.mxu0 0
    %362 = vmatpush2.bf16.msra.mxu0 0
    %363 = vmatprep.subr.bf16.mxu0 0
    %364 = vmatpush2.bf16.msra.mxu0 0
    %365 = vmatprep.subr.bf16.mxu0 0
    %366 = vmatpush2.bf16.msra.mxu0 0
    %367 = vmatprep.subr.bf16.mxu0 0
    %368 = vmatpush2.bf16.msra.mxu0 0
    %369 = vmatprep.subr.bf16.mxu0 0
    %370 = vmatpush2.bf16.msra.mxu0 0
    %371 = vmatprep.subr.bf16.mxu0 0
    %372 = vmatpush2.bf16.msra.mxu0 0
    %373 = vmatprep.subr.bf16.mxu0 0
    %374 = vmatpush2.bf16.msra.mxu0 0
    %375 = vmatprep.mubr.bf16.mxu0 0
    %376 = vmatmul.mubr.bf16.gmra.mxu0 %v271
    %v377 = vpop.f32.mrf.mxu0
    %v378 = vadd.f32 %v293, %v377
    %v379 = vpop.f32.mrf.mxu0
    %v380 = vpop.f32.mrf.mxu0
    %v381 = vadd.f32 %v293, %v380
    %v382 = vpop.f32.mrf.mxu0
    %383 = vdwg.mxu0
    %v384 = vpack.c.bf16 %v381, %v378
    %v386 = vunpack.c.l.b16 %v384
    %v387 = vunpack.c.h.b16 %v384
    %v388 = vpack.c.b16 %v386, %v386
    %v389 = vpack.c.b16 %v387, %v387
    %392 = vst [vmem:[#allocation10] sm:$0xf] %v388
    %393 = vst [vmem:[#allocation10 + $0x4] sm:$0xf] %v389
    // Predicated region
    $region46: #{tpu_custom_call.1} parent=1 // pred_check
      _
    $region47: #{tpu_custom_call.1} parent=1 // pred_check_branch
      %395 = sbr.rel (0) target = $region49
    $region48: #{tpu_custom_call.1} parent=1 // pred_region
      %s397 = ssub.s32 128, 128
      %398 = vsyncadd [#allocation4], %s397
      %s399 = sshll.u32 [#allocation10], 4
      %s400 = int_to_ptr.vmem [resolvable:$true] %s399
      %405 = dma.vmem_to_hbm [thread:$0]  %s400, 128, %s7, [#allocation4], 64, 64, 4
    $region49: #{tpu_custom_call.1} parent=1 // pred_fallthru
      _
    // Predicated region
    $region50: #{tpu_custom_call.1} parent=1 // pred_check
      _
    $region51: #{tpu_custom_call.1} parent=1 // pred_check_branch
      %407 = sbr.rel (0) target = $region53
    $region52: #{tpu_custom_call.1} parent=1 // pred_region
      %408 = dma.done [#allocation4], 128
    $region53: #{tpu_custom_call.1} parent=1 // pred_fallthru
      _
    %409 = vsyncpa [#allocation3], 1
    %410 = vsyncpa [#allocation6], 1
    %411 = vsyncpa [#allocation9], 1
    %412 = vsyncpa [#allocation4], 1

</llo_original>
